<compile_context>
chip_gen: v5e
topology: v5e:2x2
jax: 0.10.0
libtpu: 0.0.40
codegen_flags: <defaults>
</compile_context>

<pallas_src>
import functools

import numpy as np
import jax
import jax.numpy as jnp
from jax.experimental import pallas as pl
from jax.experimental.pallas import tpu as pltpu

NEG_SLOPE = 0.01   # PyTorch nn.LeakyReLU default
BN_EPS = 1e-5      # PyTorch nn.BatchNorm2d default


def _round_up(n, m):
    return ((n + m - 1) // m) * m


def _pick_divisor(n, candidates):
    # n is a multiple of 128; pick the largest candidate (multiple of 128) dividing n.
    for c in candidates:
        if c <= n and n % c == 0:
            return c
    return 128


# ----------------------------------------------------------------------------
# Pallas kernels
# ----------------------------------------------------------------------------
def _gemm_kernel(p_ref, w_ref, s_ref, b_ref, *rest, leaky, has_res):
    """Tiled GEMM, fused per-column scale/bias (+ optional residual add + LeakyReLU)."""
    if has_res:
        r_ref, o_ref, acc_ref = rest
    else:
        r_ref = None
        o_ref, acc_ref = rest

    @pl.when(pl.program_id(2) == 0)
    def _():
        acc_ref[...] = jnp.zeros_like(acc_ref)

    acc_ref[...] += jnp.dot(p_ref[...], w_ref[...],
                            preferred_element_type=jnp.float32)

    @pl.when(pl.program_id(2) == pl.num_programs(2) - 1)
    def _():
        y = acc_ref[...] * s_ref[...] + b_ref[...]
        if r_ref is not None:
            y = y + r_ref[...]                       # residual add in f32
        if leaky:
            y = jnp.where(y > 0, y, NEG_SLOPE * y)
        o_ref[...] = y.astype(o_ref.dtype)


@functools.partial(jax.jit, static_argnames=("leaky",))
def _gemm_affine_jit(P, W, scale, bias, residual, *, leaky):
    M, K = P.shape
    N = W.shape[1]

    # ---- tile selection (tile-multiple padding only, no pow2 bucketing) ----
    tm = 256 if M >= 512 else _round_up(M, 8)
    Mp = _round_up(M, tm)
    Kp = _round_up(K, 128)
    tk = _pick_divisor(Kp, (1024, 896, 768, 640, 512, 384, 256, 128))
    Np = _round_up(N, 128)
    tn = _pick_divisor(Np, (512, 256, 128))

    # bf16 operands, f32 accumulation; jnp.pad fuses inside this jit.
    Pp = jnp.pad(P, ((0, Mp - M), (0, Kp - K))).astype(jnp.bfloat16)
    Wp = jnp.pad(W, ((0, Kp - K), (0, Np - N))).astype(jnp.bfloat16)
    sp = jnp.pad(scale.astype(jnp.float32), (0, Np - N)).reshape(1, Np)
    bp = jnp.pad(bias.astype(jnp.float32), (0, Np - N)).reshape(1, Np)

    in_specs = [
        pl.BlockSpec((tm, tk), lambda i, j, k: (i, k)),
        pl.BlockSpec((tk, tn), lambda i, j, k: (k, j)),
        pl.BlockSpec((1, tn), lambda i, j, k: (0, j)),
        pl.BlockSpec((1, tn), lambda i, j, k: (0, j)),
    ]
    args = [Pp, Wp, sp, bp]
    has_res = residual is not None
    if has_res:
        Rp = jnp.pad(residual.astype(jnp.float32), ((0, Mp - M), (0, Np - N)))
        in_specs.append(pl.BlockSpec((tm, tn), lambda i, j, k: (i, j)))
        args.append(Rp)

    out = pl.pallas_call(
        functools.partial(_gemm_kernel, leaky=leaky, has_res=has_res),
        out_shape=jax.ShapeDtypeStruct((Mp, Np), jnp.float32),
        grid_spec=pltpu.PrefetchScalarGridSpec(
            num_scalar_prefetch=0,
            grid=(Mp // tm, Np // tn, Kp // tk),
            in_specs=in_specs,
            out_specs=pl.BlockSpec((tm, tn), lambda i, j, k: (i, j)),
            scratch_shapes=[pltpu.VMEM((tm, tn), jnp.float32)],
        ),
        compiler_params=pltpu.CompilerParams(
            dimension_semantics=("parallel", "parallel", "arbitrary"),
            vmem_limit_bytes=32 * 1024 * 1024),
    )(*args)
    if Mp != M or Np != N:
        out = out[:M, :N]
    return out


def gemm_affine(P, W, scale, bias, leaky, residual=None):
    return _gemm_affine_jit(P, W, scale, bias, residual, leaky=leaky)


def _max4_kernel(a_ref, b_ref, c_ref, d_ref, o_ref):
    o_ref[...] = jnp.maximum(jnp.maximum(a_ref[...], b_ref[...]),
                             jnp.maximum(c_ref[...], d_ref[...]))


@jax.jit
def _max4(a, b, c, d):
    R, C = a.shape
    # ~512 KiB f32 per block, lane-dense last dim (C is the flattened Wo*C dim).
    max_rows = max(8, (131072 // max(C, 1)) // 8 * 8)
    tr = min(_round_up(R, 8), max_rows)
    Rp = _round_up(R, tr)

    def padr(t):
        return jnp.pad(t, ((0, Rp - R), (0, 0))) if Rp != R else t

    spec = pl.BlockSpec((tr, C), lambda i: (i, 0))
    out = pl.pallas_call(
        _max4_kernel,
        out_shape=jax.ShapeDtypeStruct((Rp, C), a.dtype),
        grid_spec=pltpu.PrefetchScalarGridSpec(
            num_scalar_prefetch=0,
            grid=(Rp // tr,),
            in_specs=[spec] * 4,
            out_specs=spec,
        ),
        compiler_params=pltpu.CompilerParams(
            dimension_semantics=("parallel",)),
    )(padr(a), padr(b), padr(c), padr(d))
    return out[:R] if Rp != R else out


# ----------------------------------------------------------------------------
# Conv / pool wrappers (glue around the Pallas kernels)
# ----------------------------------------------------------------------------
def _im2col(x, kh, kw, stride, pad, dil):
    # TODO(synk): tap gathering still materializes the im2col matrix in HBM (bf16);
    #             a fully in-kernel (ky,kx) grid-axis gather would avoid it entirely.
    x = x.astype(jnp.bfloat16)
    N, H, W, C = x.shape
    xp = jnp.pad(x, ((0, 0), (pad, pad), (pad, pad), (0, 0)))
    Hp, Wp = H + 2 * pad, W + 2 * pad
    Ho = (Hp - dil * (kh - 1) - 1) // stride + 1
    Wo = (Wp - dil * (kw - 1) - 1) // stride + 1
    cols = []
    for i in range(kh):
        for j in range(kw):
            patch = xp[:, i * dil:i * dil + stride * (Ho - 1) + 1:stride,
                       j * dil:j * dil + stride * (Wo - 1) + 1:stride, :]
            cols.append(patch)
    if len(cols) == 1:
        P = cols[0].reshape(N * Ho * Wo, C)
    else:
        P = jnp.stack(cols, axis=3).reshape(N * Ho * Wo, kh * kw * C)
    return P, Ho, Wo


def _conv_gemm(x, w_oihw, scale, bias, stride, pad, dil, leaky, residual=None):
    N = x.shape[0]
    Cout, Cin, kh, kw = w_oihw.shape
    P, Ho, Wo = _im2col(x, kh, kw, stride, pad, dil)
    Wmat = jnp.transpose(w_oihw, (2, 3, 1, 0)).reshape(kh * kw * Cin, Cout)
    r2d = None if residual is None else residual.reshape(N * Ho * Wo, Cout)
    out = gemm_affine(P, Wmat, scale, bias, leaky, r2d)
    return out.reshape(N, Ho, Wo, Cout)


def _conv_transpose_subpixel(x, p):
    """ConvTranspose2d via sub-pixel (phase) decomposition.

    Only the non-zero taps of the equivalent zero-stuffed convolution are computed.
    Phases sharing the same input-tap offsets are batched into ONE GEMM (weight
    columns concatenated) and the full output is assembled with a single
    stack/transpose/reshape when every phase has the same size (true for all
    deconvs in this network)."""
    xb = x.astype(jnp.bfloat16)
    N, H, W, Cin = x.shape
    w_eq = p["w"]                       # flipped, channel-transposed fwd-conv kernel
    Cout, _, kh, kw = w_eq.shape
    s, pad, op = p["stride"], p["pad"], p["out_pad"]
    lo = kh - 1 - pad
    H_out = (H - 1) * s - 2 * pad + kh + op
    W_out = (W - 1) * s - 2 * pad + kw + op
    scale, bias = p["scale"], p["bias"]
    bias_f32 = bias.astype(jnp.float32)

    def taps(r, k):
        t = [i for i in range(k) if (i + r - lo) % s == 0]
        return t, [(r + i - lo) // s for i in t]

    phases = {}     # (rh, rw) -> ("bias", Qh, Qw) | ("data", array)
    groups = {}     # (offs_h, offs_w, Qh, Qw) -> [(rh, rw, taps_h, taps_w), ...]
    for rh in range(s):
        Qh = (H_out - rh + s - 1) // s
        if Qh <= 0:
            continue
        th, oh = taps(rh, kh)
        for rw in range(s):
            Qw = (W_out - rw + s - 1) // s
            if Qw <= 0:
                continue
            tw, ow = taps(rw, kw)
            if not th or not tw:
                phases[(rh, rw)] = ("bias", Qh, Qw)
                continue
            key = (tuple(oh), tuple(ow), Qh, Qw)
            groups.setdefault(key, []).append((rh, rw, tuple(th), tuple(tw)))

    for (offs_h, offs_w, Qh, Qw), members in groups.items():
        # One shared im2col patch matrix per group (single pad + slice set).
        pad_lo_h = max(0, -min(offs_h))
        pad_hi_h = max(0, (Qh - 1) + max(offs_h) - (H - 1))
        pad_lo_w = max(0, -min(offs_w))
        pad_hi_w = max(0, (Qw - 1) + max(offs_w) - (W - 1))
        xp = xb
        if pad_lo_h or pad_hi_h or pad_lo_w or pad_hi_w:
            xp = jnp.pad(xb, ((0, 0), (pad_lo_h, pad_hi_h),
                              (pad_lo_w, pad_hi_w), (0, 0)))
        cols = []
        for eh in offs_h:
            for ew in offs_w:
                cols.append(xp[:, pad_lo_h + eh:pad_lo_h + eh + Qh,
                               pad_lo_w + ew:pad_lo_w + ew + Qw, :])
        if len(cols) == 1:
            P = cols[0].reshape(N * Qh * Qw, Cin)
        else:
            P = jnp.stack(cols, axis=3).reshape(N * Qh * Qw, len(cols) * Cin)

        # Concatenate the member phases' weight columns -> one wider GEMM.
        wmats, biases, scales = [], [], []
        for (rh, rw, th, tw) in members:
            rows = [jnp.transpose(w_eq[:, :, ih, iw]) for ih in th for iw in tw]
            wmats.append(jnp.concatenate(rows, axis=0) if len(rows) > 1 else rows[0])
            biases.append(bias)
            scales.append(scale)
        Wg = jnp.concatenate(wmats, axis=1) if len(wmats) > 1 else wmats[0]
        bg = jnp.concatenate(biases) if len(biases) > 1 else biases[0]
        sg = jnp.concatenate(scales) if len(scales) > 1 else scales[0]

        out = gemm_affine(P, Wg, sg, bg, p["leaky"])         # (N*Qh*Qw, G*Cout)
        out = out.reshape(N, Qh, Qw, len(members), Cout)
        for gi, (rh, rw, _, _) in enumerate(members):
            phases[(rh, rw)] = ("data", out[:, :, :, gi, :])

    # ---- assembly ----
    if H_out % s == 0 and W_out % s == 0:
        # Fast path: all phases have identical size -> interleave by reshape.
        Qh0, Qw0 = H_out // s, W_out // s
        plist = []
        for rh in range(s):
            for rw in range(s):
                ph = phases[(rh, rw)]
                if ph[0] == "bias":
                    plist.append(jnp.broadcast_to(bias_f32, (N, Qh0, Qw0, Cout)))
                else:
                    plist.append(ph[1])
        y = jnp.stack(plist, axis=0).reshape(s, s, N, Qh0, Qw0, Cout)
        y = jnp.transpose(y, (2, 3, 0, 4, 1, 5)).reshape(N, H_out, W_out, Cout)
        return y

    # Fallback: strided scatter per phase (not hit by this network's deconvs).
    y = jnp.zeros((N, H_out, W_out, Cout), jnp.float32) + bias_f32
    for (rh, rw), ph in phases.items():
        if ph[0] == "data":
            y = y.at[:, rh::s, rw::s, :].set(ph[1])
    return y


def apply_conv(x, p, residual=None, leaky=None):
    lk = p["leaky"] if leaky is None else leaky
    if p["transpose"]:
        return _conv_transpose_subpixel(x, p)
    return _conv_gemm(x, p["w"], p["scale"], p["bias"],
                      p["stride"], p["pad"], p["dil"], lk, residual)


def maxpool2x2(x):
    # TODO(synk): could be folded into the producing conv's output tiling; kept as a
    #             standalone gridded Pallas elementwise kernel for simplicity.
    N, H, W, C = x.shape
    Ho, Wo = H // 2, W // 2
    # flatten (Wo, C) into the last dim so stores are lane-dense (>=512 wide)
    a = x[:, 0::2, 0::2, :].reshape(N * Ho, Wo * C)
    b = x[:, 0::2, 1::2, :].reshape(N * Ho, Wo * C)
    c = x[:, 1::2, 0::2, :].reshape(N * Ho, Wo * C)
    d = x[:, 1::2, 1::2, :].reshape(N * Ho, Wo * C)
    return _max4(a, b, c, d).reshape(N, Ho, Wo, C)


# ----------------------------------------------------------------------------
# Deterministic parameter construction (synthetic weights, no checkpoint)
# ----------------------------------------------------------------------------
class KeyGen:
    def __init__(self, seed):
        self._key = jax.random.PRNGKey(seed)

    def __call__(self):
        self._key, sub = jax.random.split(self._key)
        return sub


def make_conv(kg, in_ch, out_ch, k, stride=1, pad=0, dil=1, bn=True, leaky=False):
    w = jax.random.normal(kg(), (out_ch, in_ch, k, k), jnp.float32)
    w = w / float(np.sqrt(in_ch * k * k))
    b = 0.01 * jax.random.normal(kg(), (out_ch,), jnp.float32)
    if bn:
        # inference-mode BatchNorm (running_mean=0, running_var=1, gamma=1, beta=0)
        s = jnp.full((out_ch,), 1.0 / float(np.sqrt(1.0 + BN_EPS)), jnp.float32)
        bias = b * s
    else:
        s = jnp.ones((out_ch,), jnp.float32)
        bias = b
    return dict(w=w, scale=s, bias=bias, stride=stride, pad=pad, dil=dil,
                leaky=leaky, transpose=False, out_pad=0)


def make_convT(kg, in_ch, out_ch, k, stride, pad=0, out_pad=0):
    wt = jax.random.normal(kg(), (in_ch, out_ch, k, k), jnp.float32)
    wt = wt / float(np.sqrt(in_ch * k * k))
    b = 0.01 * jax.random.normal(kg(), (out_ch,), jnp.float32)
    # equivalent forward conv weight: transpose in/out channels and flip spatially
    w_eq = jnp.transpose(wt, (1, 0, 2, 3))[:, :, ::-1, ::-1]
    return dict(w=w_eq, scale=jnp.ones((out_ch,), jnp.float32), bias=b,
                stride=stride, pad=pad, dil=1, leaky=False, transpose=True,
                out_pad=out_pad)


def make_resb(kg, in_ch, out_ch):
    q = out_ch // 4
    return dict(
        b0=make_conv(kg, in_ch, out_ch, 1, pad=0),
        b1=make_conv(kg, in_ch, q, 3, pad=1),
        b2_1=make_conv(kg, in_ch, q, 3, pad=1, leaky=True),
        b2_2=make_conv(kg, q, q, 3, pad=1),
        b3_1=make_conv(kg, in_ch, q, 3, pad=1, leaky=True),
        b3_2=make_conv(kg, q, q, 3, pad=1, leaky=True),
        b3_3=make_conv(kg, q, q, 3, pad=2, dil=2),
        b4_1=make_conv(kg, in_ch, q, 3, pad=1, leaky=True),
        b4_2=make_conv(kg, q, q, 3, pad=1, leaky=True),
        b4_3=make_conv(kg, q, q, 3, pad=2, dil=2, leaky=True),
        b4_4=make_conv(kg, q, q, 3, pad=5, dil=5),
    )


def make_upb(kg, in_ch, out_ch):
    return dict(up=make_convT(kg, in_ch, out_ch, 3, stride=2, pad=1, out_pad=1),
                res=make_resb(kg, out_ch * 2, out_ch))


def make_uhrnet(seed=1234):
    kg = KeyGen(seed)
    return dict(
        down1=make_resb(kg, 1, 64),
        down2=make_resb(kg, 64, 128),
        down3=make_resb(kg, 128, 256),
        down4=make_resb(kg, 256, 512),
        res=make_resb(kg, 512, 1024),
        up1=make_upb(kg, 1024, 512),
        up2=make_upb(kg, 512, 256),
        up3=make_upb(kg, 256, 128),
        up4=make_upb(kg, 128, 64),
        outc=make_conv(kg, 64, 1, 1, bn=False),
        up1_=make_convT(kg, 128, 32, 3, stride=2, pad=1, out_pad=1),
        up2_=make_convT(kg, 256, 32, 3, stride=4, pad=0, out_pad=1),
        up3_=make_convT(kg, 512, 32, 3, stride=8, pad=0, out_pad=5),
        cov1=make_conv(kg, 96, 64, 3, pad=1, leaky=True),
        cov1_=make_conv(kg, 128, 64, 3, pad=1, leaky=True),
        down0_=make_conv(kg, 64, 64, 2, stride=2, bn=False),
        up2__=make_convT(kg, 256, 64, 3, stride=2, pad=1, out_pad=1),
        up3__=make_convT(kg, 512, 64, 3, stride=4, pad=0, out_pad=1),
        cov2=make_conv(kg, 192, 128, 3, pad=1, leaky=True),
        cov2_=make_conv(kg, 256, 128, 3, pad=1, leaky=True),
        down0__=make_conv(kg, 64, 128, 4, stride=4, bn=False),
        down1_=make_conv(kg, 128, 128, 2, stride=2, bn=False),
        up3___=make_convT(kg, 512, 128, 3, stride=2, pad=1, out_pad=1),
        cov3=make_conv(kg, 384, 256, 3, pad=1, leaky=True),
        cov3_=make_conv(kg, 512, 256, 3, pad=1, leaky=True),
    )


# ----------------------------------------------------------------------------
# Model forward (mirrors UHRNet.forward)
# ----------------------------------------------------------------------------
def resb(x, p):
    x1 = apply_conv(x, p["b1"])
    t = apply_conv(x, p["b2_1"])
    x2 = apply_conv(t, p["b2_2"])
    t = apply_conv(x, p["b3_1"])
    t = apply_conv(t, p["b3_2"])
    x3 = apply_conv(t, p["b3_3"])
    t = apply_conv(x, p["b4_1"])
    t = apply_conv(t, p["b4_2"])
    t = apply_conv(t, p["b4_3"])
    x4 = apply_conv(t, p["b4_4"])
    x5 = jnp.concatenate([x1, x2, x3, x4], axis=-1)
    # Branch0 (1x1 conv + BN) with the residual add + LeakyReLU fused into its
    # GEMM epilogue -> no separate add/activation pass over HBM.
    return apply_conv(x, p["b0"], residual=x5, leaky=True)


def downb(x, p):
    x1 = resb(x, p)
    return maxpool2x2(x1), x1


def upb(x, skip, p):
    x1 = apply_conv(x, p["up"])
    x2 = jnp.concatenate([x1, skip], axis=-1)
    return resb(x2, p["res"])


def uhrnet_forward(x_nchw, P):
    x = jnp.transpose(x_nchw, (0, 2, 3, 1)).astype(jnp.float32)  # NCHW -> NHWC
    x1, x1_ = downb(x, P["down1"])
    x2, x2_ = downb(x1, P["down2"])
    x3, x3_ = downb(x2, P["down3"])
    x4, x4_ = downb(x3, P["down4"])
    # TODO(synk): nn.Dropout(0.3) is identity in inference mode; no stochastic drop.
    x5 = resb(x4, P["res"])
    x6 = upb(x5, x4_, P["up1"])

    x3__ = jnp.concatenate([apply_conv(x1_, P["down0__"]),
                            apply_conv(x2_, P["down1_"]),
                            apply_conv(x4_, P["up3___"])], axis=-1)
    x3__ = apply_conv(x3__, P["cov3"])
    x3__ = jnp.concatenate([x3_, x3__], axis=-1)
    x3__ = apply_conv(x3__, P["cov3_"])
    x7 = upb(x6, x3__, P["up2"])

    x2__ = jnp.concatenate([apply_conv(x1_, P["down0_"]),
                            apply_conv(x3_, P["up2__"]),
                            apply_conv(x4_, P["up3__"])], axis=-1)
    x2__ = apply_conv(x2__, P["cov2"])
    x2__ = jnp.concatenate([x2_, x2__], axis=-1)
    x2__ = apply_conv(x2__, P["cov2_"])
    x8 = upb(x7, x2__, P["up3"])

    x1__ = jnp.concatenate([apply_conv(x4_, P["up3_"]),
                            apply_conv(x3_, P["up2_"]),
                            apply_conv(x2_, P["up1_"])], axis=-1)
    x1__ = apply_conv(x1__, P["cov1"])
    x1__ = jnp.concatenate([x1_, x1__], axis=-1)
    x1__ = apply_conv(x1__, P["cov1_"])
    x9 = upb(x8, x1__, P["up4"])

    x10 = apply_conv(x9, P["outc"])
    return jnp.transpose(x10, (0, 3, 1, 2))  # NHWC -> NCHW


if __name__ == "__main__":
    params = make_uhrnet(seed=1234)
    x = jax.random.normal(jax.random.PRNGKey(0), (1, 1, 16, 16), jnp.float32)
    y = uhrnet_forward(x, params)
    y = jax.block_until_ready(y)
    assert y.shape == (1, 1, 16, 16), y.shape
    assert bool(jnp.all(jnp.isfinite(y)))
    print("KERNEL_OK")
</pallas_src>

<mosaic_0001>
module attributes {stable_mosaic.version = 11 : i64} {
  func.func @_gemm_kernel(%arg0: i32, %arg1: i32, %arg2: i32, %arg3: memref<256x128xbf16, #tpu.memory_space<vmem>>, %arg4: memref<128x128xbf16, #tpu.memory_space<vmem>>, %arg5: memref<1x128xf32, #tpu.memory_space<vmem>>, %arg6: memref<1x128xf32, #tpu.memory_space<vmem>>, %arg7: memref<256x128xf32, #tpu.memory_space<vmem>>, %arg8: memref<256x128xf32, #tpu.memory_space<vmem>>) attributes {dimension_semantics = [#tpu.dimension_semantics<parallel>, #tpu.dimension_semantics<parallel>, #tpu.dimension_semantics<arbitrary>], iteration_bounds = array<i64: 1, 1, 1>, scalar_prefetch = 0 : i64, scratch_operands = 1 : i64, tpu.core_type = #tpu.core_type<tc>, window_params = [{transform_indices = @transform_0, window_bounds = array<i64: 256, 128>}, {transform_indices = @transform_1, window_bounds = array<i64: 128, 128>}, {transform_indices = @transform_2, window_bounds = array<i64: 1, 128>}, {transform_indices = @transform_3, window_bounds = array<i64: 1, 128>}, {transform_indices = @transform_4, window_bounds = array<i64: 256, 128>}]} {
    %c0_i32 = arith.constant 0 : i32
    %0 = arith.cmpi eq, %arg2, %c0_i32 : i32
    %1 = arith.extui %0 : i1 to i32
    %c0_i32_0 = arith.constant 0 : i32
    %2 = arith.cmpi ne, %1, %c0_i32_0 : i32
    scf.if %2 {
      %cst_10 = arith.constant 0.000000e+00 : f32
      %12 = vector.broadcast %cst_10 : f32 to vector<256x128xf32>
      %c0_11 = arith.constant 0 : index
      %c0_12 = arith.constant 0 : index
      %13 = vector.load %arg8[%c0_11, %c0_12] : memref<256x128xf32, #tpu.memory_space<vmem>>, vector<256x128xf32>
      tpu.vector_store %arg8[%c0_11, %c0_12], %12 {strides = array<i32>} : memref<256x128xf32, #tpu.memory_space<vmem>>, vector<256x128xf32>,
    } else {
    }
    %c0 = arith.constant 0 : index
    %c0_1 = arith.constant 0 : index
    %3 = vector.load %arg8[%c0, %c0_1] : memref<256x128xf32, #tpu.memory_space<vmem>>, vector<256x128xf32>
    %c0_2 = arith.constant 0 : index
    %c0_3 = arith.constant 0 : index
    %4 = vector.load %arg3[%c0_2, %c0_3] : memref<256x128xbf16, #tpu.memory_space<vmem>>, vector<256x128xbf16>
    %c0_4 = arith.constant 0 : index
    %c0_5 = arith.constant 0 : index
    %5 = vector.load %arg4[%c0_4, %c0_5] : memref<128x128xbf16, #tpu.memory_space<vmem>>, vector<128x128xbf16>
    %cst = arith.constant dense<0.000000e+00> : vector<256x128xf32>
    %6 = tpu.matmul %4, %5, %cst {dimension_numbers = #tpu.dot_dimension_numbers<[1], [0], [0], [1], [0, 0, 1, 1], [], []>} : vector<256x128xbf16>, vector<128x128xbf16>, vector<256x128xf32> -> vector<256x128xf32>
    %7 = arith.addf %3, %6 : vector<256x128xf32>
    %c0_6 = arith.constant 0 : index
    %c0_7 = arith.constant 0 : index
    %8 = vector.load %arg8[%c0_6, %c0_7] : memref<256x128xf32, #tpu.memory_space<vmem>>, vector<256x128xf32>
    tpu.vector_store %arg8[%c0_6, %c0_7], %7 {strides = array<i32>} : memref<256x128xf32, #tpu.memory_space<vmem>>, vector<256x128xf32>,
    %c0_i32_8 = arith.constant 0 : i32
    %9 = arith.cmpi eq, %arg2, %c0_i32_8 : i32
    %10 = arith.extui %9 : i1 to i32
    %c0_i32_9 = arith.constant 0 : i32
    %11 = arith.cmpi ne, %10, %c0_i32_9 : i32
    scf.if %11 {
      %c0_10 = arith.constant 0 : index
      %c0_11 = arith.constant 0 : index
      %12 = vector.load %arg8[%c0_10, %c0_11] : memref<256x128xf32, #tpu.memory_space<vmem>>, vector<256x128xf32>
      %c0_12 = arith.constant 0 : index
      %c0_13 = arith.constant 0 : index
      %13 = vector.load %arg5[%c0_12, %c0_13] : memref<1x128xf32, #tpu.memory_space<vmem>>, vector<1x128xf32>
      %14 = vector.broadcast %13 : vector<1x128xf32> to vector<256x128xf32>
      %15 = arith.mulf %12, %14 : vector<256x128xf32>
      %c0_14 = arith.constant 0 : index
      %c0_15 = arith.constant 0 : index
      %16 = vector.load %arg6[%c0_14, %c0_15] : memref<1x128xf32, #tpu.memory_space<vmem>>, vector<1x128xf32>
      %17 = vector.broadcast %16 : vector<1x128xf32> to vector<256x128xf32>
      %18 = arith.addf %15, %17 : vector<256x128xf32>
      %c0_16 = arith.constant 0 : index
      %c0_17 = arith.constant 0 : index
      %19 = vector.load %arg7[%c0_16, %c0_17] : memref<256x128xf32, #tpu.memory_space<vmem>>, vector<256x128xf32>
      tpu.vector_store %arg7[%c0_16, %c0_17], %18 {strides = array<i32>} : memref<256x128xf32, #tpu.memory_space<vmem>>, vector<256x128xf32>,
    } else {
    }
    return
  }
  func.func @transform_0(%arg0: i32, %arg1: i32, %arg2: i32) -> (i32, i32) {
    %c0_i32 = arith.constant 0 : i32
    return %arg0, %arg2 : i32, i32
  }
  func.func @transform_1(%arg0: i32, %arg1: i32, %arg2: i32) -> (i32, i32) {
    %c0_i32 = arith.constant 0 : i32
    return %arg2, %arg1 : i32, i32
  }
  func.func @transform_2(%arg0: i32, %arg1: i32, %arg2: i32) -> (i32, i32) {
    %c0_i32 = arith.constant 0 : i32
    %c0_i32_0 = arith.constant 0 : i32
    return %c0_i32, %arg1 : i32, i32
  }
  func.func @transform_3(%arg0: i32, %arg1: i32, %arg2: i32) -> (i32, i32) {
    %c0_i32 = arith.constant 0 : i32
    %c0_i32_0 = arith.constant 0 : i32
    return %c0_i32, %arg1 : i32, i32
  }
  func.func @transform_4(%arg0: i32, %arg1: i32, %arg2: i32) -> (i32, i32) {
    %c0_i32 = arith.constant 0 : i32
    return %arg0, %arg1 : i32, i32
  }
}

</mosaic_0001>

<llo_original>
// kernel: _gemm_affine_jit.1
$region0: #{_gemm_affine_jit.1}
  #allocation0 [shape = 'u32[]', space=smem, size = 0x4, offset = 0x4, fixed_abs, tag = 'smem constant byte address 0x4 - core index']
  #allocation1 [shape = 'u32[72,128]{1,0:T(1,128)}', space=vmem, size = 0x9000, scoped, tag = 'internal scratch']
  #allocation2 [shape = 'f32[256,128]{1,0:T(8,128)}', space=vmem, size = 0x20000, scoped, tag = 'scratch operand']
  %s0 = inlined_call_operand.vmem [shape: bf16[256,128], index: 0, kind: input, shape index: {}]
  %s1 = inlined_call_operand.vmem [shape: bf16[128,128], index: 1, kind: input, shape index: {}]
  %s2 = inlined_call_operand.vmem [shape: f32[1,128], index: 2, kind: input, shape index: {}]
  %s3 = inlined_call_operand.vmem [shape: f32[1,128], index: 3, kind: input, shape index: {}]
  %s4 = inlined_call_operand.vmem [shape: f32[256,128], index: 4, kind: output, shape index: {}]
  %s5 = sld [smem:[#allocation0]]
  $region34: #{_gemm_affine_jit.1} parent=0
    _
  %s7 = ssub.s32 1, %s5
  %s8 = scalar_select 0, %s7, %s5
  // Predicated region
  $region2: #{_gemm_affine_jit.1} parent=0 // pred_check
    _
  $region3: #{_gemm_affine_jit.1} parent=0 // pred_check_branch
    %10 = sbr.rel (0) target = $region5
  $region4: #{_gemm_affine_jit.1} parent=0 // pred_region
    _
  $region5: #{_gemm_affine_jit.1} parent=0 // pred_fallthru
    _
  // Predicated region
  $region6: #{_gemm_affine_jit.1} parent=0 // pred_check
    _
  $region7: #{_gemm_affine_jit.1} parent=0 // pred_check_branch
    %12 = sbr.rel (0) target = $region9
  $region8: #{_gemm_affine_jit.1} parent=0 // pred_region
    _
  $region9: #{_gemm_affine_jit.1} parent=0 // pred_fallthru
    _
  // Predicated region
  $region10: #{_gemm_affine_jit.1} parent=0 // pred_check
    _
  $region11: #{_gemm_affine_jit.1} parent=0 // pred_check_branch
    %14 = sbr.rel (0) target = $region13
  $region12: #{_gemm_affine_jit.1} parent=0 // pred_region
    _
  $region13: #{_gemm_affine_jit.1} parent=0 // pred_fallthru
    _
  // Predicated region
  $region14: #{_gemm_affine_jit.1} parent=0 // pred_check
    _
  $region15: #{_gemm_affine_jit.1} parent=0 // pred_check_branch
    %16 = sbr.rel (0) target = $region17
  $region16: #{_gemm_affine_jit.1} parent=0 // pred_region
    _
  $region17: #{_gemm_affine_jit.1} parent=0 // pred_fallthru
    _
  %p17 = scmp.eq.s32.totalorder 0, 0
  // Predicated region
  $region18: #{_gemm_affine_jit.1} parent=0 // pred_check
    %p18 = pneg %p17
  $region19: #{_gemm_affine_jit.1} parent=0 // pred_check_branch
    %20 = sbr.rel (%p18) target = $region21
  $region20: #{_gemm_affine_jit.1} parent=0 // pred_region
    %21 = vst [vmem:[#allocation2] sm:$0xff] 0.0
    %22 = vst [vmem:[#allocation2 + $0x8] sm:$0xff] 0.0
    %23 = vst [vmem:[#allocation2 + $0x10] sm:$0xff] 0.0
    %24 = vst [vmem:[#allocation2 + $0x18] sm:$0xff] 0.0
    %25 = vst [vmem:[#allocation2 + $0x20] sm:$0xff] 0.0
    %26 = vst [vmem:[#allocation2 + $0x28] sm:$0xff] 0.0
    %27 = vst [vmem:[#allocation2 + $0x30] sm:$0xff] 0.0
    %28 = vst [vmem:[#allocation2 + $0x38] sm:$0xff] 0.0
    %29 = vst [vmem:[#allocation2 + $0x40] sm:$0xff] 0.0
    %30 = vst [vmem:[#allocation2 + $0x48] sm:$0xff] 0.0
    %31 = vst [vmem:[#allocation2 + $0x50] sm:$0xff] 0.0
    %32 = vst [vmem:[#allocation2 + $0x58] sm:$0xff] 0.0
    %33 = vst [vmem:[#allocation2 + $0x60] sm:$0xff] 0.0
    %34 = vst [vmem:[#allocation2 + $0x68] sm:$0xff] 0.0
    %35 = vst [vmem:[#allocation2 + $0x70] sm:$0xff] 0.0
    %36 = vst [vmem:[#allocation2 + $0x78] sm:$0xff] 0.0
    %37 = vst [vmem:[#allocation2 + $0x80] sm:$0xff] 0.0
    %38 = vst [vmem:[#allocation2 + $0x88] sm:$0xff] 0.0
    %39 = vst [vmem:[#allocation2 + $0x90] sm:$0xff] 0.0
    %40 = vst [vmem:[#allocation2 + $0x98] sm:$0xff] 0.0
    %41 = vst [vmem:[#allocation2 + $0xa0] sm:$0xff] 0.0
    %42 = vst [vmem:[#allocation2 + $0xa8] sm:$0xff] 0.0
    %43 = vst [vmem:[#allocation2 + $0xb0] sm:$0xff] 0.0
    %44 = vst [vmem:[#allocation2 + $0xb8] sm:$0xff] 0.0
    %45 = vst [vmem:[#allocation2 + $0xc0] sm:$0xff] 0.0
    %46 = vst [vmem:[#allocation2 + $0xc8] sm:$0xff] 0.0
    %47 = vst [vmem:[#allocation2 + $0xd0] sm:$0xff] 0.0
    %48 = vst [vmem:[#allocation2 + $0xd8] sm:$0xff] 0.0
    %49 = vst [vmem:[#allocation2 + $0xe0] sm:$0xff] 0.0
    %50 = vst [vmem:[#allocation2 + $0xe8] sm:$0xff] 0.0
    %51 = vst [vmem:[#allocation2 + $0xf0] sm:$0xff] 0.0
    %52 = vst [vmem:[#allocation2 + $0xf8] sm:$0xff] 0.0
  $region21: #{_gemm_affine_jit.1} parent=0 // pred_fallthru
    _
  %v53 = vld [vmem:[#allocation2] sm:$0xff]
  %v54 = vld [vmem:[#allocation2 + $0x8] sm:$0xff]
  %v55 = vld [vmem:[#allocation2 + $0x10] sm:$0xff]
  %v56 = vld [vmem:[#allocation2 + $0x18] sm:$0xff]
  %v57 = vld [vmem:[#allocation2 + $0x20] sm:$0xff]
  %v58 = vld [vmem:[#allocation2 + $0x28] sm:$0xff]
  %v59 = vld [vmem:[#allocation2 + $0x30] sm:$0xff]
  %v60 = vld [vmem:[#allocation2 + $0x38] sm:$0xff]
  %v61 = vld [vmem:[#allocation2 + $0x40] sm:$0xff]
  %v62 = vld [vmem:[#allocation2 + $0x48] sm:$0xff]
  %v63 = vld [vmem:[#allocation2 + $0x50] sm:$0xff]
  %v64 = vld [vmem:[#allocation2 + $0x58] sm:$0xff]
  %v65 = vld [vmem:[#allocation2 + $0x60] sm:$0xff]
  %v66 = vld [vmem:[#allocation2 + $0x68] sm:$0xff]
  %v67 = vld [vmem:[#allocation2 + $0x70] sm:$0xff]
  %v68 = vld [vmem:[#allocation2 + $0x78] sm:$0xff]
  %v69 = vld [vmem:[#allocation2 + $0x80] sm:$0xff]
  %v70 = vld [vmem:[#allocation2 + $0x88] sm:$0xff]
  %v71 = vld [vmem:[#allocation2 + $0x90] sm:$0xff]
  %v72 = vld [vmem:[#allocation2 + $0x98] sm:$0xff]
  %v73 = vld [vmem:[#allocation2 + $0xa0] sm:$0xff]
  %v74 = vld [vmem:[#allocation2 + $0xa8] sm:$0xff]
  %v75 = vld [vmem:[#allocation2 + $0xb0] sm:$0xff]
  %v76 = vld [vmem:[#allocation2 + $0xb8] sm:$0xff]
  %v77 = vld [vmem:[#allocation2 + $0xc0] sm:$0xff]
  %v78 = vld [vmem:[#allocation2 + $0xc8] sm:$0xff]
  %v79 = vld [vmem:[#allocation2 + $0xd0] sm:$0xff]
  %v80 = vld [vmem:[#allocation2 + $0xd8] sm:$0xff]
  %v81 = vld [vmem:[#allocation2 + $0xe0] sm:$0xff]
  %v82 = vld [vmem:[#allocation2 + $0xe8] sm:$0xff]
  %v83 = vld [vmem:[#allocation2 + $0xf0] sm:$0xff]
  %v84 = vld [vmem:[#allocation2 + $0xf8] sm:$0xff]
  %v85 = vld [vmem:[%s0] sm:$0xf]
  %v86 = vld [vmem:[%s0 + $0x4] sm:$0xf]
  %v87 = vld [vmem:[%s0 + $0x8] sm:$0xf]
  %v88 = vld [vmem:[%s0 + $0xc] sm:$0xf]
  %v89 = vld [vmem:[%s0 + $0x10] sm:$0xf]
  %v90 = vld [vmem:[%s0 + $0x14] sm:$0xf]
  %v91 = vld [vmem:[%s0 + $0x18] sm:$0xf]
  %v92 = vld [vmem:[%s0 + $0x1c] sm:$0xf]
  %v93 = vld [vmem:[%s0 + $0x20] sm:$0xf]
  %v94 = vld [vmem:[%s0 + $0x24] sm:$0xf]
  %v95 = vld [vmem:[%s0 + $0x28] sm:$0xf]
  %v96 = vld [vmem:[%s0 + $0x2c] sm:$0xf]
  %v97 = vld [vmem:[%s0 + $0x30] sm:$0xf]
  %v98 = vld [vmem:[%s0 + $0x34] sm:$0xf]
  %v99 = vld [vmem:[%s0 + $0x38] sm:$0xf]
  %v100 = vld [vmem:[%s0 + $0x3c] sm:$0xf]
  %v101 = vld [vmem:[%s0 + $0x40] sm:$0xf]
  %v102 = vld [vmem:[%s0 + $0x44] sm:$0xf]
  %v103 = vld [vmem:[%s0 + $0x48] sm:$0xf]
  %v104 = vld [vmem:[%s0 + $0x4c] sm:$0xf]
  %v105 = vld [vmem:[%s0 + $0x50] sm:$0xf]
  %v106 = vld [vmem:[%s0 + $0x54] sm:$0xf]
  %v107 = vld [vmem:[%s0 + $0x58] sm:$0xf]
  %v108 = vld [vmem:[%s0 + $0x5c] sm:$0xf]
  %v109 = vld [vmem:[%s0 + $0x60] sm:$0xf]
  %v110 = vld [vmem:[%s0 + $0x64] sm:$0xf]
  %v111 = vld [vmem:[%s0 + $0x68] sm:$0xf]
  %v112 = vld [vmem:[%s0 + $0x6c] sm:$0xf]
  %v113 = vld [vmem:[%s0 + $0x70] sm:$0xf]
  %v114 = vld [vmem:[%s0 + $0x74] sm:$0xf]
  %v115 = vld [vmem:[%s0 + $0x78] sm:$0xf]
  %v116 = vld [vmem:[%s0 + $0x7c] sm:$0xf]
  %v117 = vld [vmem:[%s1] sm:$0xf]
  %v118 = vld [vmem:[%s1 + $0x4] sm:$0xf]
  %v119 = vld [vmem:[%s1 + $0x8] sm:$0xf]
  %v120 = vld [vmem:[%s1 + $0xc] sm:$0xf]
  %v121 = vld [vmem:[%s1 + $0x10] sm:$0xf]
  %v122 = vld [vmem:[%s1 + $0x14] sm:$0xf]
  %v123 = vld [vmem:[%s1 + $0x18] sm:$0xf]
  %v124 = vld [vmem:[%s1 + $0x1c] sm:$0xf]
  %v125 = vld [vmem:[%s1 + $0x20] sm:$0xf]
  %v126 = vld [vmem:[%s1 + $0x24] sm:$0xf]
  %v127 = vld [vmem:[%s1 + $0x28] sm:$0xf]
  %v128 = vld [vmem:[%s1 + $0x2c] sm:$0xf]
  %v129 = vld [vmem:[%s1 + $0x30] sm:$0xf]
  %v130 = vld [vmem:[%s1 + $0x34] sm:$0xf]
  %v131 = vld [vmem:[%s1 + $0x38] sm:$0xf]
  %v132 = vld [vmem:[%s1 + $0x3c] sm:$0xf]
  %v165 = vunpack.c.l.b16 %v85
  %v166 = vunpack.c.l.b16 %v86
  %v167 = vunpack.c.l.b16 %v87
  %v168 = vunpack.c.l.b16 %v88
  %v169 = vunpack.c.l.b16 %v89
  %v170 = vunpack.c.l.b16 %v90
  %v171 = vunpack.c.l.b16 %v91
  %v172 = vunpack.c.l.b16 %v92
  %v173 = vunpack.c.l.b16 %v93
  %v174 = vunpack.c.l.b16 %v94
  %v175 = vunpack.c.l.b16 %v95
  %v176 = vunpack.c.l.b16 %v96
  %v177 = vunpack.c.l.b16 %v97
  %v178 = vunpack.c.l.b16 %v98
  %v179 = vunpack.c.l.b16 %v99
  %v180 = vunpack.c.l.b16 %v100
  %v181 = vunpack.c.l.b16 %v101
  %v182 = vunpack.c.l.b16 %v102
  %v183 = vunpack.c.l.b16 %v103
  %v184 = vunpack.c.l.b16 %v104
  %v185 = vunpack.c.l.b16 %v105
  %v186 = vunpack.c.l.b16 %v106
  %v187 = vunpack.c.l.b16 %v107
  %v188 = vunpack.c.l.b16 %v108
  %v189 = vunpack.c.l.b16 %v109
  %v190 = vunpack.c.l.b16 %v110
  %v191 = vunpack.c.l.b16 %v111
  %v192 = vunpack.c.l.b16 %v112
  %v193 = vunpack.c.l.b16 %v113
  %v194 = vunpack.c.l.b16 %v114
  %v195 = vunpack.c.l.b16 %v115
  %v196 = vunpack.c.l.b16 %v116
  %v197 = vpack.c.b16 %v166, %v165
  %v198 = vpack.c.b16 %v168, %v167
  %v199 = vpack.c.b16 %v170, %v169
  %v200 = vpack.c.b16 %v172, %v171
  %v201 = vpack.c.b16 %v174, %v173
  %v202 = vpack.c.b16 %v176, %v175
  %v203 = vpack.c.b16 %v178, %v177
  %v204 = vpack.c.b16 %v180, %v179
  %v205 = vpack.c.b16 %v182, %v181
  %v206 = vpack.c.b16 %v184, %v183
  %v207 = vpack.c.b16 %v186, %v185
  %v208 = vpack.c.b16 %v188, %v187
  %v209 = vpack.c.b16 %v190, %v189
  %v210 = vpack.c.b16 %v192, %v191
  %v211 = vpack.c.b16 %v194, %v193
  %v212 = vpack.c.b16 %v196, %v195
  %v245 = vunpack.c.l.b16 %v117
  %v246 = vunpack.c.l.b16 %v118
  %v247 = vunpack.c.l.b16 %v119
  %v248 = vunpack.c.l.b16 %v120
  %v249 = vunpack.c.l.b16 %v121
  %v250 = vunpack.c.l.b16 %v122
  %v251 = vunpack.c.l.b16 %v123
  %v252 = vunpack.c.l.b16 %v124
  %v253 = vunpack.c.l.b16 %v125
  %v254 = vunpack.c.l.b16 %v126
  %v255 = vunpack.c.l.b16 %v127
  %v256 = vunpack.c.l.b16 %v128
  %v257 = vunpack.c.l.b16 %v129
  %v258 = vunpack.c.l.b16 %v130
  %v259 = vunpack.c.l.b16 %v131
  %v260 = vunpack.c.l.b16 %v132
  %v261 = vpack.c.b16 %v246, %v245
  %v262 = vpack.c.b16 %v248, %v247
  %v263 = vpack.c.b16 %v250, %v249
  %v264 = vpack.c.b16 %v252, %v251
  %v265 = vpack.c.b16 %v254, %v253
  %v266 = vpack.c.b16 %v256, %v255
  %v267 = vpack.c.b16 %v258, %v257
  %v268 = vpack.c.b16 %v260, %v259
  %277 = vmatpush.bf16.msra.mxu0 %v268
  %278 = vmatpush.bf16.msra.mxu0 %v267
  %279 = vmatpush.bf16.msra.mxu0 %v266
  %280 = vmatpush.bf16.msra.mxu0 %v265
  %281 = vmatpush.bf16.msra.mxu0 %v264
  %282 = vmatpush.bf16.msra.mxu0 %v263
  %283 = vmatpush.bf16.msra.mxu0 %v262
  %284 = vmatpush.bf16.msra.mxu0 %v261
  %285 = vmatmul.bf16.gmra.mxu0 %v197
  %v286 = vpop.f32.mrf.mxu0
  %v287 = vadd.f32 0.0, %v286
  %v288 = vpop.f32.mrf.mxu0
  %v289 = vadd.f32 0.0, %v288
  %290 = vmatmul.bf16.gmra.mxu0 %v198
  %v291 = vpop.f32.mrf.mxu0
  %v292 = vadd.f32 0.0, %v291
  %v293 = vpop.f32.mrf.mxu0
  %v294 = vadd.f32 0.0, %v293
  %295 = vmatmul.bf16.gmra.mxu0 %v199
  %v296 = vpop.f32.mrf.mxu0
  %v297 = vadd.f32 0.0, %v296
  %v298 = vpop.f32.mrf.mxu0
  %v299 = vadd.f32 0.0, %v298
  %300 = vmatmul.bf16.gmra.mxu0 %v200
  %v301 = vpop.f32.mrf.mxu0
  %v302 = vadd.f32 0.0, %v301
  %v303 = vpop.f32.mrf.mxu0
  %v304 = vadd.f32 0.0, %v303
  %305 = vmatmul.bf16.gmra.mxu0 %v201
  %v306 = vpop.f32.mrf.mxu0
  %v307 = vadd.f32 0.0, %v306
  %v308 = vpop.f32.mrf.mxu0
  %v309 = vadd.f32 0.0, %v308
  %310 = vmatmul.bf16.gmra.mxu0 %v202
  %v311 = vpop.f32.mrf.mxu0
  %v312 = vadd.f32 0.0, %v311
  %v313 = vpop.f32.mrf.mxu0
  %v314 = vadd.f32 0.0, %v313
  %315 = vmatmul.bf16.gmra.mxu0 %v203
  %v316 = vpop.f32.mrf.mxu0
  %v317 = vadd.f32 0.0, %v316
  %v318 = vpop.f32.mrf.mxu0
  %v319 = vadd.f32 0.0, %v318
  %320 = vmatmul.bf16.gmra.mxu0 %v204
  %v321 = vpop.f32.mrf.mxu0
  %v322 = vadd.f32 0.0, %v321
  %v323 = vpop.f32.mrf.mxu0
  %v324 = vadd.f32 0.0, %v323
  %325 = vmatmul.bf16.gmra.mxu0 %v205
  %v326 = vpop.f32.mrf.mxu0
  %v327 = vadd.f32 0.0, %v326
  %v328 = vpop.f32.mrf.mxu0
  %v329 = vadd.f32 0.0, %v328
  %330 = vmatmul.bf16.gmra.mxu0 %v206
  %v331 = vpop.f32.mrf.mxu0
  %v332 = vadd.f32 0.0, %v331
  %v333 = vpop.f32.mrf.mxu0
  %v334 = vadd.f32 0.0, %v333
  %335 = vmatmul.bf16.gmra.mxu0 %v207
  %v336 = vpop.f32.mrf.mxu0
  %v337 = vadd.f32 0.0, %v336
  %v338 = vpop.f32.mrf.mxu0
  %v339 = vadd.f32 0.0, %v338
  %340 = vmatmul.bf16.gmra.mxu0 %v208
  %v341 = vpop.f32.mrf.mxu0
  %v342 = vadd.f32 0.0, %v341
  %v343 = vpop.f32.mrf.mxu0
  %v344 = vadd.f32 0.0, %v343
  %345 = vmatmul.bf16.gmra.mxu0 %v209
  %v346 = vpop.f32.mrf.mxu0
  %v347 = vadd.f32 0.0, %v346
  %v348 = vpop.f32.mrf.mxu0
  %v349 = vadd.f32 0.0, %v348
  %350 = vmatmul.bf16.gmra.mxu0 %v210
  %v351 = vpop.f32.mrf.mxu0
  %v352 = vadd.f32 0.0, %v351
  %v353 = vpop.f32.mrf.mxu0
  %v354 = vadd.f32 0.0, %v353
  %355 = vmatmul.bf16.gmra.mxu0 %v211
  %v356 = vpop.f32.mrf.mxu0
  %v357 = vadd.f32 0.0, %v356
  %v358 = vpop.f32.mrf.mxu0
  %v359 = vadd.f32 0.0, %v358
  %360 = vmatmul.bf16.gmra.mxu0 %v212
  %v361 = vpop.f32.mrf.mxu0
  %v362 = vadd.f32 0.0, %v361
  %v363 = vpop.f32.mrf.mxu0
  %v364 = vadd.f32 0.0, %v363
  %365 = vdwg.mxu0
  %v366 = vadd.f32 %v53, %v287
  %v367 = vadd.f32 %v54, %v289
  %v368 = vadd.f32 %v55, %v292
  %v369 = vadd.f32 %v56, %v294
  %v370 = vadd.f32 %v57, %v297
  %v371 = vadd.f32 %v58, %v299
  %v372 = vadd.f32 %v59, %v302
  %v373 = vadd.f32 %v60, %v304
  %v374 = vadd.f32 %v61, %v307
  %v375 = vadd.f32 %v62, %v309
  %v376 = vadd.f32 %v63, %v312
  %v377 = vadd.f32 %v64, %v314
  %v378 = vadd.f32 %v65, %v317
  %v379 = vadd.f32 %v66, %v319
  %v380 = vadd.f32 %v67, %v322
  %v381 = vadd.f32 %v68, %v324
  %v382 = vadd.f32 %v69, %v327
  %v383 = vadd.f32 %v70, %v329
  %v384 = vadd.f32 %v71, %v332
  %v385 = vadd.f32 %v72, %v334
  %v386 = vadd.f32 %v73, %v337
  %v387 = vadd.f32 %v74, %v339
  %v388 = vadd.f32 %v75, %v342
  %v389 = vadd.f32 %v76, %v344
  %v390 = vadd.f32 %v77, %v347
  %v391 = vadd.f32 %v78, %v349
  %v392 = vadd.f32 %v79, %v352
  %v393 = vadd.f32 %v80, %v354
  %v394 = vadd.f32 %v81, %v357
  %v395 = vadd.f32 %v82, %v359
  %v396 = vadd.f32 %v83, %v362
  %v397 = vadd.f32 %v84, %v364
  %398 = vst [vmem:[#allocation2] sm:$0xff] %v366
  %399 = vst [vmem:[#allocation2 + $0x8] sm:$0xff] %v367
  %400 = vst [vmem:[#allocation2 + $0x10] sm:$0xff] %v368
  %401 = vst [vmem:[#allocation2 + $0x18] sm:$0xff] %v369
  %402 = vst [vmem:[#allocation2 + $0x20] sm:$0xff] %v370
  %403 = vst [vmem:[#allocation2 + $0x28] sm:$0xff] %v371
  %404 = vst [vmem:[#allocation2 + $0x30] sm:$0xff] %v372
  %405 = vst [vmem:[#allocation2 + $0x38] sm:$0xff] %v373
  %406 = vst [vmem:[#allocation2 + $0x40] sm:$0xff] %v374
  %407 = vst [vmem:[#allocation2 + $0x48] sm:$0xff] %v375
  %408 = vst [vmem:[#allocation2 + $0x50] sm:$0xff] %v376
  %409 = vst [vmem:[#allocation2 + $0x58] sm:$0xff] %v377
  %410 = vst [vmem:[#allocation2 + $0x60] sm:$0xff] %v378
  %411 = vst [vmem:[#allocation2 + $0x68] sm:$0xff] %v379
  %412 = vst [vmem:[#allocation2 + $0x70] sm:$0xff] %v380
  %413 = vst [vmem:[#allocation2 + $0x78] sm:$0xff] %v381
  %414 = vst [vmem:[#allocation2 + $0x80] sm:$0xff] %v382
  %415 = vst [vmem:[#allocation2 + $0x88] sm:$0xff] %v383
  %416 = vst [vmem:[#allocation2 + $0x90] sm:$0xff] %v384
  %417 = vst [vmem:[#allocation2 + $0x98] sm:$0xff] %v385
  %418 = vst [vmem:[#allocation2 + $0xa0] sm:$0xff] %v386
  %419 = vst [vmem:[#allocation2 + $0xa8] sm:$0xff] %v387
  %420 = vst [vmem:[#allocation2 + $0xb0] sm:$0xff] %v388
  %421 = vst [vmem:[#allocation2 + $0xb8] sm:$0xff] %v389
  %422 = vst [vmem:[#allocation2 + $0xc0] sm:$0xff] %v390
  %423 = vst [vmem:[#allocation2 + $0xc8] sm:$0xff] %v391
  %424 = vst [vmem:[#allocation2 + $0xd0] sm:$0xff] %v392
  %425 = vst [vmem:[#allocation2 + $0xd8] sm:$0xff] %v393
  %426 = vst [vmem:[#allocation2 + $0xe0] sm:$0xff] %v394
  %427 = vst [vmem:[#allocation2 + $0xe8] sm:$0xff] %v395
  %428 = vst [vmem:[#allocation2 + $0xf0] sm:$0xff] %v396
  %429 = vst [vmem:[#allocation2 + $0xf8] sm:$0xff] %v397
  // Predicated region
  $region22: #{_gemm_affine_jit.1} parent=0 // pred_check
    %p430 = pneg %p17
  $region23: #{_gemm_affine_jit.1} parent=0 // pred_check_branch
    %432 = sbr.rel (%p430) target = $region25
  $region24: #{_gemm_affine_jit.1} parent=0 // pred_region
    %v433 = vld [vmem:[#allocation2] sm:$0xff]
    %v434 = vld [vmem:[#allocation2 + $0x8] sm:$0xff]
    %v435 = vld [vmem:[#allocation2 + $0x10] sm:$0xff]
    %v436 = vld [vmem:[#allocation2 + $0x18] sm:$0xff]
    %v437 = vld [vmem:[#allocation2 + $0x20] sm:$0xff]
    %v438 = vld [vmem:[#allocation2 + $0x28] sm:$0xff]
    %v439 = vld [vmem:[#allocation2 + $0x30] sm:$0xff]
    %v440 = vld [vmem:[#allocation2 + $0x38] sm:$0xff]
    %v441 = vld [vmem:[#allocation2 + $0x40] sm:$0xff]
    %v442 = vld [vmem:[#allocation2 + $0x48] sm:$0xff]
    %v443 = vld [vmem:[#allocation2 + $0x50] sm:$0xff]
    %v444 = vld [vmem:[#allocation2 + $0x58] sm:$0xff]
    %v445 = vld [vmem:[#allocation2 + $0x60] sm:$0xff]
    %v446 = vld [vmem:[#allocation2 + $0x68] sm:$0xff]
    %v447 = vld [vmem:[#allocation2 + $0x70] sm:$0xff]
    %v448 = vld [vmem:[#allocation2 + $0x78] sm:$0xff]
    %v449 = vld [vmem:[#allocation2 + $0x80] sm:$0xff]
    %v450 = vld [vmem:[#allocation2 + $0x88] sm:$0xff]
    %v451 = vld [vmem:[#allocation2 + $0x90] sm:$0xff]
    %v452 = vld [vmem:[#allocation2 + $0x98] sm:$0xff]
    %v453 = vld [vmem:[#allocation2 + $0xa0] sm:$0xff]
    %v454 = vld [vmem:[#allocation2 + $0xa8] sm:$0xff]
    %v455 = vld [vmem:[#allocation2 + $0xb0] sm:$0xff]
    %v456 = vld [vmem:[#allocation2 + $0xb8] sm:$0xff]
    %v457 = vld [vmem:[#allocation2 + $0xc0] sm:$0xff]
    %v458 = vld [vmem:[#allocation2 + $0xc8] sm:$0xff]
    %v459 = vld [vmem:[#allocation2 + $0xd0] sm:$0xff]
    %v460 = vld [vmem:[#allocation2 + $0xd8] sm:$0xff]
    %v461 = vld [vmem:[#allocation2 + $0xe0] sm:$0xff]
    %v462 = vld [vmem:[#allocation2 + $0xe8] sm:$0xff]
    %v463 = vld [vmem:[#allocation2 + $0xf0] sm:$0xff]
    %v464 = vld [vmem:[#allocation2 + $0xf8] sm:$0xff]
    %v465 = vld [vmem:[%s2] sm:$0x1]
    %v467 = vperm.slane %v465, 0
    %v469 = vmul.f32 %v433, %v467
    %v470 = vmul.f32 %v434, %v467
    %v471 = vmul.f32 %v435, %v467
    %v472 = vmul.f32 %v436, %v467
    %v473 = vmul.f32 %v437, %v467
    %v474 = vmul.f32 %v438, %v467
    %v475 = vmul.f32 %v439, %v467
    %v476 = vmul.f32 %v440, %v467
    %v477 = vmul.f32 %v441, %v467
    %v478 = vmul.f32 %v442, %v467
    %v479 = vmul.f32 %v443, %v467
    %v480 = vmul.f32 %v444, %v467
    %v481 = vmul.f32 %v445, %v467
    %v482 = vmul.f32 %v446, %v467
    %v483 = vmul.f32 %v447, %v467
    %v484 = vmul.f32 %v448, %v467
    %v485 = vmul.f32 %v449, %v467
    %v486 = vmul.f32 %v450, %v467
    %v487 = vmul.f32 %v451, %v467
    %v488 = vmul.f32 %v452, %v467
    %v489 = vmul.f32 %v453, %v467
    %v490 = vmul.f32 %v454, %v467
    %v491 = vmul.f32 %v455, %v467
    %v492 = vmul.f32 %v456, %v467
    %v493 = vmul.f32 %v457, %v467
    %v494 = vmul.f32 %v458, %v467
    %v495 = vmul.f32 %v459, %v467
    %v496 = vmul.f32 %v460, %v467
    %v497 = vmul.f32 %v461, %v467
    %v498 = vmul.f32 %v462, %v467
    %v499 = vmul.f32 %v463, %v467
    %v500 = vmul.f32 %v464, %v467
    %v501 = vld [vmem:[%s3] sm:$0x1]
    %v503 = vperm.slane %v501, 0
    %v505 = vadd.f32 %v469, %v503
    %v506 = vadd.f32 %v470, %v503
    %v507 = vadd.f32 %v471, %v503
    %v508 = vadd.f32 %v472, %v503
    %v509 = vadd.f32 %v473, %v503
    %v510 = vadd.f32 %v474, %v503
    %v511 = vadd.f32 %v475, %v503
    %v512 = vadd.f32 %v476, %v503
    %v513 = vadd.f32 %v477, %v503
    %v514 = vadd.f32 %v478, %v503
    %v515 = vadd.f32 %v479, %v503
    %v516 = vadd.f32 %v480, %v503
    %v517 = vadd.f32 %v481, %v503
    %v518 = vadd.f32 %v482, %v503
    %v519 = vadd.f32 %v483, %v503
    %v520 = vadd.f32 %v484, %v503
    %v521 = vadd.f32 %v485, %v503
    %v522 = vadd.f32 %v486, %v503
    %v523 = vadd.f32 %v487, %v503
    %v524 = vadd.f32 %v488, %v503
    %v525 = vadd.f32 %v489, %v503
    %v526 = vadd.f32 %v490, %v503
    %v527 = vadd.f32 %v491, %v503
    %v528 = vadd.f32 %v492, %v503
    %v529 = vadd.f32 %v493, %v503
    %v530 = vadd.f32 %v494, %v503
    %v531 = vadd.f32 %v495, %v503
    %v532 = vadd.f32 %v496, %v503
    %v533 = vadd.f32 %v497, %v503
    %v534 = vadd.f32 %v498, %v503
    %v535 = vadd.f32 %v499, %v503
    %v536 = vadd.f32 %v500, %v503
    %537 = vst [vmem:[%s4] sm:$0xff] %v505
    %538 = vst [vmem:[%s4 + $0x8] sm:$0xff] %v506
    %539 = vst [vmem:[%s4 + $0x10] sm:$0xff] %v507
    %540 = vst [vmem:[%s4 + $0x18] sm:$0xff] %v508
    %541 = vst [vmem:[%s4 + $0x20] sm:$0xff] %v509
    %542 = vst [vmem:[%s4 + $0x28] sm:$0xff] %v510
    %543 = vst [vmem:[%s4 + $0x30] sm:$0xff] %v511
    %544 = vst [vmem:[%s4 + $0x38] sm:$0xff] %v512
    %545 = vst [vmem:[%s4 + $0x40] sm:$0xff] %v513
    %546 = vst [vmem:[%s4 + $0x48] sm:$0xff] %v514
    %547 = vst [vmem:[%s4 + $0x50] sm:$0xff] %v515
    %548 = vst [vmem:[%s4 + $0x58] sm:$0xff] %v516
    %549 = vst [vmem:[%s4 + $0x60] sm:$0xff] %v517
    %550 = vst [vmem:[%s4 + $0x68] sm:$0xff] %v518
    %551 = vst [vmem:[%s4 + $0x70] sm:$0xff] %v519
    %552 = vst [vmem:[%s4 + $0x78] sm:$0xff] %v520
    %553 = vst [vmem:[%s4 + $0x80] sm:$0xff] %v521
    %554 = vst [vmem:[%s4 + $0x88] sm:$0xff] %v522
    %555 = vst [vmem:[%s4 + $0x90] sm:$0xff] %v523
    %556 = vst [vmem:[%s4 + $0x98] sm:$0xff] %v524
    %557 = vst [vmem:[%s4 + $0xa0] sm:$0xff] %v525
    %558 = vst [vmem:[%s4 + $0xa8] sm:$0xff] %v526
    %559 = vst [vmem:[%s4 + $0xb0] sm:$0xff] %v527
    %560 = vst [vmem:[%s4 + $0xb8] sm:$0xff] %v528
    %561 = vst [vmem:[%s4 + $0xc0] sm:$0xff] %v529
    %562 = vst [vmem:[%s4 + $0xc8] sm:$0xff] %v530
    %563 = vst [vmem:[%s4 + $0xd0] sm:$0xff] %v531
    %564 = vst [vmem:[%s4 + $0xd8] sm:$0xff] %v532
    %565 = vst [vmem:[%s4 + $0xe0] sm:$0xff] %v533
    %566 = vst [vmem:[%s4 + $0xe8] sm:$0xff] %v534
    %567 = vst [vmem:[%s4 + $0xf0] sm:$0xff] %v535
    %568 = vst [vmem:[%s4 + $0xf8] sm:$0xff] %v536
  $region25: #{_gemm_affine_jit.1} parent=0 // pred_fallthru
    _
  // Predicated region
  $region26: #{_gemm_affine_jit.1} parent=0 // pred_check
    _
  $region27: #{_gemm_affine_jit.1} parent=0 // pred_check_branch
    %570 = sbr.rel (0) target = $region29
  $region28: #{_gemm_affine_jit.1} parent=0 // pred_region
    _
  $region29: #{_gemm_affine_jit.1} parent=0 // pred_fallthru
    _
  // Predicated region
  $region30: #{_gemm_affine_jit.1} parent=0 // pred_check
    _
  $region31: #{_gemm_affine_jit.1} parent=0 // pred_check_branch
    %572 = sbr.rel (0) target = $region33
  $region32: #{_gemm_affine_jit.1} parent=0 // pred_region
    _
  $region33: #{_gemm_affine_jit.1} parent=0 // pred_fallthru
    _

</llo_original>
